<compile_context>
chip_gen: v5e
topology: v5e:2x2
jax: 0.10.0
libtpu: 0.0.40
codegen_flags: <defaults>
</compile_context>

<pallas_src>
import jax
import jax.numpy as jnp
from jax.experimental import pallas as pl
from jax.experimental.pallas import tpu as pltpu

_VMEM_HEADROOM = 8 * 2**20        # leave room for compiler-internal scratch
_VMEM_BUDGET_CAP = 100 * 2**20    # never ask for more (v5e/v6e have 128 MiB)
_SMALL_PROBLEM_BYTES = 6 * 2**20  # whole-problem-resident (grid=(1,)) fast path


def _round_up(x, m):
    return ((x + m - 1) // m) * m


def _vmem_capacity_bytes():
    """Generation-aware VMEM capacity (v7x: 64 MiB/core, v5e/v6e: 128 MiB)."""
    try:
        cap = getattr(pltpu.get_tpu_info(), "vmem_capacity_bytes", None)
    except Exception:   # hardware probe only; safe conservative fallback below
        cap = None
    return int(cap) if cap else 64 * 2**20


def _vmem_bytes(tile_b, in_size, emb_size, c_bytes, o_bytes):
    """Coarse per-core VMEM footprint (weights counted double-buffered)."""
    lane = lambda n: _round_up(n, 128)
    sub = lambda n: _round_up(n, 8)
    return (2 * sub(tile_b) * lane(in_size) * c_bytes                        # x tiles
            + 2 * sub(tile_b) * lane(emb_size) * o_bytes                     # out tiles
            + 2 * (sub(in_size) + sub(emb_size)) * lane(emb_size) * c_bytes  # W1 + W2
            + 4 * 8 * lane(emb_size) * 4)                                    # biases


def _mlp_kernel(x_ref, w1_ref, b1_ref, w2_ref, b2_ref, o_ref):
    # Linear 1 (MXU, f32 accumulate) + bias + ReLU (VPU, f32 -- correct on v5e too).
    h = jnp.dot(x_ref[...], w1_ref[...], preferred_element_type=jnp.float32)
    h = jnp.maximum(h + b1_ref[...], 0.0)            # b1_ref is (1, emb) -> broadcasts
    # Linear 2 (MXU, f32 accumulate) + bias.  No VMEM staging of `h`.
    y = jnp.dot(h.astype(w2_ref.dtype), w2_ref[...], preferred_element_type=jnp.float32)
    o_ref[...] = (y + b2_ref[...]).astype(o_ref.dtype)


def unet_embedding(x, w1, b1, w2, b2, *, tile_b=None, compute_dtype=None):
    """Pallas implementation of UnetEmbedding.forward.

    x : (B, in_size)
    w1: (in_size, emb_size)   b1: (emb_size,)
    w2: (emb_size, emb_size)  b2: (emb_size,)
    compute_dtype: dtype fed to the MXU (jnp.bfloat16 is the fast path on v6e/v7x);
                   accumulation / bias / ReLU are always f32.  Defaults to x.dtype
                   to preserve the PyTorch module's numerics exactly.
    returns: (B, emb_size) in x.dtype
    """
    B, in_size = x.shape
    emb_size = w1.shape[1]
    assert w1.shape == (in_size, emb_size)
    assert b1.shape == (emb_size,)
    assert w2.shape == (emb_size, emb_size)
    assert b2.shape == (emb_size,)

    out_dtype = x.dtype
    if compute_dtype is None:
        compute_dtype = x.dtype
    c_bytes = jnp.dtype(compute_dtype).itemsize
    o_bytes = jnp.dtype(out_dtype).itemsize

    budget = min(_vmem_capacity_bytes() - _VMEM_HEADROOM, _VMEM_BUDGET_CAP)

    # ---- batch-tile selection ------------------------------------------------
    total_bytes = (B * in_size * c_bytes + B * emb_size * o_bytes
                   + (in_size + emb_size) * emb_size * c_bytes + 2 * emb_size * 4)
    if tile_b is None:
        if total_bytes <= _SMALL_PROBLEM_BYTES:
            # Whole problem resident: one grid step, no per-step pipeline overhead.
            tile_b = B
        else:
            # Large tiles amortize the ~0.35us/step overhead; keep >=4 grid steps
            # so both v7x TensorCores get >=2 steps each ("parallel" batch axis).
            tile_b = min(1024, max(16, _round_up(pl.cdiv(B, 4), 16)))
            while tile_b > 16 and _vmem_bytes(tile_b, in_size, emb_size,
                                              c_bytes, o_bytes) > budget:
                tile_b = max(16, _round_up(tile_b // 2, 16))
    else:
        assert tile_b == B or tile_b % 8 == 0, "tile_b must equal B or be a multiple of 8"

    grid = (pl.cdiv(B, tile_b),)

    # ---- dtype plumbing (no pads; casts only if the dtype actually changes) ---
    def cast(a, dt):
        return a if a.dtype == dt else a.astype(dt)

    x_c = cast(x, compute_dtype)
    w1_c = cast(w1, compute_dtype)
    w2_c = cast(w2, compute_dtype)
    b1_2d = cast(b1, jnp.float32).reshape(1, emb_size)   # f32 epilogue (v5e-safe)
    b2_2d = cast(b2, jnp.float32).reshape(1, emb_size)

    est = _vmem_bytes(tile_b, in_size, emb_size, c_bytes, o_bytes)
    vmem_limit = int(min(max(32 * 2**20, 2 * est), budget))

    cost = pl.CostEstimate(
        flops=2 * B * in_size * emb_size + 2 * B * emb_size * emb_size,
        transcendentals=0,
        bytes_accessed=(x_c.size * c_bytes
                        + (w1_c.size + w2_c.size) * c_bytes
                        + (b1_2d.size + b2_2d.size) * 4
                        + B * emb_size * o_bytes),
    )

    # Weights/biases are grid-invariant (index_map -> (0, 0)): DMA'd once, resident.
    # Feature dims use full-extent blocks, so no 128-padding of x / W / out is
    # needed; a ragged last batch block is handled by Pallas' masked output stores
    # (matmul rows are independent, so garbage OOB input rows are harmless).
    # TODO(synk): emb_size is assumed small enough for W1/W2 to stay VMEM-resident
    # (no K/N tiling) -- true for typical UnetEmbedding sizes.
    out = pl.pallas_call(
        _mlp_kernel,
        out_shape=jax.ShapeDtypeStruct((B, emb_size), out_dtype),
        grid_spec=pltpu.PrefetchScalarGridSpec(
            num_scalar_prefetch=0,
            grid=grid,
            in_specs=[
                pl.BlockSpec((tile_b, in_size), lambda i: (i, 0)),     # x tile
                pl.BlockSpec((in_size, emb_size), lambda i: (0, 0)),   # W1 (resident)
                pl.BlockSpec((1, emb_size), lambda i: (0, 0)),         # b1
                pl.BlockSpec((emb_size, emb_size), lambda i: (0, 0)),  # W2 (resident)
                pl.BlockSpec((1, emb_size), lambda i: (0, 0)),         # b2
            ],
            out_specs=pl.BlockSpec((tile_b, emb_size), lambda i: (i, 0)),
        ),
        compiler_params=pltpu.CompilerParams(
            dimension_semantics=("parallel",),
            vmem_limit_bytes=vmem_limit),
        cost_estimate=cost,
    )(x_c, w1_c, b1_2d, w2_c, b2_2d)

    return out


def reference(x, w1, b1, w2, b2):
    h = jnp.maximum(x @ w1 + b1, 0.0)
    return h @ w2 + b2


if __name__ == "__main__":
    # Small shapes consistent with the module: Linear(in_size, emb_size) stack.
    batch, in_size, emb_size = 512, 32, 64

    key = jax.random.PRNGKey(0)
    kx, k1, k2, k3, k4 = jax.random.split(key, 5)

    # Mimic PyTorch's default U(-1/sqrt(fan_in), 1/sqrt(fan_in)) Linear init.
    bound1 = 1.0 / jnp.sqrt(in_size)
    bound2 = 1.0 / jnp.sqrt(emb_size)
    x = jax.random.normal(kx, (batch, in_size), dtype=jnp.float32)
    w1 = jax.random.uniform(k1, (in_size, emb_size), jnp.float32, -bound1, bound1)
    b1 = jax.random.uniform(k2, (emb_size,), jnp.float32, -bound1, bound1)
    w2 = jax.random.uniform(k3, (emb_size, emb_size), jnp.float32, -bound2, bound2)
    b2 = jax.random.uniform(k4, (emb_size,), jnp.float32, -bound2, bound2)

    ref = reference(x, w1, b1, w2, b2)

    # 1) Default f32 path, whole-problem-resident fast path (grid=(1,)).
    out = jax.block_until_ready(unet_embedding(x, w1, b1, w2, b2))
    assert out.shape == (batch, emb_size)
    assert jnp.allclose(out, ref, atol=1e-5, rtol=1e-5), "f32 fast-path mismatch"

    # 2) Tiled path (4 grid steps) -- same numerics.
    out_t = jax.block_until_ready(unet_embedding(x, w1, b1, w2, b2, tile_b=128))
    assert jnp.allclose(out_t, ref, atol=1e-5, rtol=1e-5), "tiled-path mismatch"

    # 3) Ragged batch with a partial last block (masked output stores).
    out_r = jax.block_until_ready(unet_embedding(x[:100], w1, b1, w2, b2, tile_b=64))
    assert jnp.allclose(out_r, ref[:100], atol=1e-5, rtol=1e-5), "ragged-batch mismatch"

    # 4) bf16 MXU inputs with f32 accumulation (fast path on v6e/v7x).
    out_bf16 = jax.block_until_ready(
        unet_embedding(x, w1, b1, w2, b2, compute_dtype=jnp.bfloat16))
    assert jnp.allclose(out_bf16, ref, atol=2e-2, rtol=2e-2), "bf16 mismatch"

    print("KERNEL_OK")
</pallas_src>

<mosaic_0001>
module attributes {stable_mosaic.version = 11 : i64} {
  func.func @_mlp_kernel(%arg0: i32, %arg1: memref<512x32xf32, #tpu.memory_space<vmem>>, %arg2: memref<32x64xf32, #tpu.memory_space<vmem>>, %arg3: memref<1x64xf32, #tpu.memory_space<vmem>>, %arg4: memref<64x64xf32, #tpu.memory_space<vmem>>, %arg5: memref<1x64xf32, #tpu.memory_space<vmem>>, %arg6: memref<512x64xf32, #tpu.memory_space<vmem>>) attributes {dimension_semantics = [#tpu.dimension_semantics<parallel>], iteration_bounds = array<i64: 1>, scalar_prefetch = 0 : i64, scratch_operands = 0 : i64, tpu.core_type = #tpu.core_type<tc>, window_params = [{transform_indices = @transform_0, window_bounds = array<i64: 512, 32>}, {pipeline_mode = #tpu.pipeline_mode<synchronous>, transform_indices = @transform_1, window_bounds = array<i64: 32, 64>}, {pipeline_mode = #tpu.pipeline_mode<synchronous>, transform_indices = @transform_2, window_bounds = array<i64: 1, 64>}, {pipeline_mode = #tpu.pipeline_mode<synchronous>, transform_indices = @transform_3, window_bounds = array<i64: 64, 64>}, {pipeline_mode = #tpu.pipeline_mode<synchronous>, transform_indices = @transform_4, window_bounds = array<i64: 1, 64>}, {transform_indices = @transform_5, window_bounds = array<i64: 512, 64>}]} {
    %c0 = arith.constant 0 : index
    %c0_0 = arith.constant 0 : index
    %0 = vector.load %arg1[%c0, %c0_0] : memref<512x32xf32, #tpu.memory_space<vmem>>, vector<512x32xf32>
    %c0_1 = arith.constant 0 : index
    %c0_2 = arith.constant 0 : index
    %1 = vector.load %arg2[%c0_1, %c0_2] : memref<32x64xf32, #tpu.memory_space<vmem>>, vector<32x64xf32>
    %cst = arith.constant dense<0.000000e+00> : vector<512x64xf32>
    %2 = tpu.matmul %0, %1, %cst {dimension_numbers = #tpu.dot_dimension_numbers<[1], [0], [0], [1], [0, 0, 1, 1], [], []>} : vector<512x32xf32>, vector<32x64xf32>, vector<512x64xf32> -> vector<512x64xf32>
    %c0_3 = arith.constant 0 : index
    %c0_4 = arith.constant 0 : index
    %3 = vector.load %arg3[%c0_3, %c0_4] : memref<1x64xf32, #tpu.memory_space<vmem>>, vector<1x64xf32>
    %4 = vector.broadcast %3 : vector<1x64xf32> to vector<512x64xf32>
    %5 = arith.addf %2, %4 : vector<512x64xf32>
    %cst_5 = arith.constant 0.000000e+00 : f32
    %6 = vector.broadcast %cst_5 : f32 to vector<512x64xf32>
    %7 = arith.maximumf %5, %6 : vector<512x64xf32>
    %c0_6 = arith.constant 0 : index
    %c0_7 = arith.constant 0 : index
    %8 = vector.load %arg4[%c0_6, %c0_7] : memref<64x64xf32, #tpu.memory_space<vmem>>, vector<64x64xf32>
    %cst_8 = arith.constant dense<0.000000e+00> : vector<512x64xf32>
    %9 = tpu.matmul %7, %8, %cst_8 {dimension_numbers = #tpu.dot_dimension_numbers<[1], [0], [0], [1], [0, 0, 1, 1], [], []>} : vector<512x64xf32>, vector<64x64xf32>, vector<512x64xf32> -> vector<512x64xf32>
    %c0_9 = arith.constant 0 : index
    %c0_10 = arith.constant 0 : index
    %10 = vector.load %arg5[%c0_9, %c0_10] : memref<1x64xf32, #tpu.memory_space<vmem>>, vector<1x64xf32>
    %11 = vector.broadcast %10 : vector<1x64xf32> to vector<512x64xf32>
    %12 = arith.addf %9, %11 : vector<512x64xf32>
    %c0_11 = arith.constant 0 : index
    %c0_12 = arith.constant 0 : index
    %13 = vector.load %arg6[%c0_11, %c0_12] : memref<512x64xf32, #tpu.memory_space<vmem>>, vector<512x64xf32>
    tpu.vector_store %arg6[%c0_11, %c0_12], %12 {strides = array<i32>} : memref<512x64xf32, #tpu.memory_space<vmem>>, vector<512x64xf32>,
    return
  }
  func.func @transform_0(%arg0: i32) -> (i32, i32) {
    %c0_i32 = arith.constant 0 : i32
    %c0_i32_0 = arith.constant 0 : i32
    return %arg0, %c0_i32 : i32, i32
  }
  func.func @transform_1(%arg0: i32) -> (i32, i32) {
    %c0_i32 = arith.constant 0 : i32
    %c0_i32_0 = arith.constant 0 : i32
    %c0_i32_1 = arith.constant 0 : i32
    return %c0_i32, %c0_i32_0 : i32, i32
  }
  func.func @transform_2(%arg0: i32) -> (i32, i32) {
    %c0_i32 = arith.constant 0 : i32
    %c0_i32_0 = arith.constant 0 : i32
    %c0_i32_1 = arith.constant 0 : i32
    return %c0_i32, %c0_i32_0 : i32, i32
  }
  func.func @transform_3(%arg0: i32) -> (i32, i32) {
    %c0_i32 = arith.constant 0 : i32
    %c0_i32_0 = arith.constant 0 : i32
    %c0_i32_1 = arith.constant 0 : i32
    return %c0_i32, %c0_i32_0 : i32, i32
  }
  func.func @transform_4(%arg0: i32) -> (i32, i32) {
    %c0_i32 = arith.constant 0 : i32
    %c0_i32_0 = arith.constant 0 : i32
    %c0_i32_1 = arith.constant 0 : i32
    return %c0_i32, %c0_i32_0 : i32, i32
  }
  func.func @transform_5(%arg0: i32) -> (i32, i32) {
    %c0_i32 = arith.constant 0 : i32
    %c0_i32_0 = arith.constant 0 : i32
    return %arg0, %c0_i32 : i32, i32
  }
}

</mosaic_0001>

<llo_original>
// kernel: tpu_custom_call.1
$region0: #{tpu_custom_call.1}
  #allocation0 [shape = 'u32[]', space=smem, size = 0x4, offset = 0x4, fixed_abs, tag = 'smem constant byte address 0x4 - core index']
  #allocation1 [shape = 'u32[72,128]{1,0:T(1,128)}', space=vmem, size = 0x9000, scoped, tag = 'internal scratch']
  %s0 = inlined_call_operand.vmem [shape: f32[512,32], index: 0, kind: input, shape index: {}]
  %s1 = inlined_call_operand.vmem [shape: f32[32,64], index: 1, kind: input, shape index: {}]
  %s2 = inlined_call_operand.vmem [shape: f32[1,64], index: 2, kind: input, shape index: {}]
  %s3 = inlined_call_operand.vmem [shape: f32[64,64], index: 3, kind: input, shape index: {}]
  %s4 = inlined_call_operand.vmem [shape: f32[1,64], index: 4, kind: input, shape index: {}]
  %s5 = inlined_call_operand.vmem [shape: f32[512,64], index: 5, kind: output, shape index: {}]
  %s6 = sld [smem:[#allocation0]]
  $region30: #{tpu_custom_call.1} parent=0
    _
  %s8 = ssub.s32 1, %s6
  %s9 = scalar_select 0, %s8, %s6
  // Predicated region
  $region2: #{tpu_custom_call.1} parent=0 // pred_check
    _
  $region3: #{tpu_custom_call.1} parent=0 // pred_check_branch
    %11 = sbr.rel (0) target = $region5
  $region4: #{tpu_custom_call.1} parent=0 // pred_region
    _
  $region5: #{tpu_custom_call.1} parent=0 // pred_fallthru
    _
  // Predicated region
  $region6: #{tpu_custom_call.1} parent=0 // pred_check
    _
  $region7: #{tpu_custom_call.1} parent=0 // pred_check_branch
    %13 = sbr.rel (0) target = $region9
  $region8: #{tpu_custom_call.1} parent=0 // pred_region
    _
  $region9: #{tpu_custom_call.1} parent=0 // pred_fallthru
    _
  // Predicated region
  $region10: #{tpu_custom_call.1} parent=0 // pred_check
    _
  $region11: #{tpu_custom_call.1} parent=0 // pred_check_branch
    %15 = sbr.rel (0) target = $region13
  $region12: #{tpu_custom_call.1} parent=0 // pred_region
    _
  $region13: #{tpu_custom_call.1} parent=0 // pred_fallthru
    _
  // Predicated region
  $region14: #{tpu_custom_call.1} parent=0 // pred_check
    _
  $region15: #{tpu_custom_call.1} parent=0 // pred_check_branch
    %17 = sbr.rel (0) target = $region17
  $region16: #{tpu_custom_call.1} parent=0 // pred_region
    _
  $region17: #{tpu_custom_call.1} parent=0 // pred_fallthru
    _
  // Predicated region
  $region18: #{tpu_custom_call.1} parent=0 // pred_check
    _
  $region19: #{tpu_custom_call.1} parent=0 // pred_check_branch
    %19 = sbr.rel (0) target = $region21
  $region20: #{tpu_custom_call.1} parent=0 // pred_region
    _
  $region21: #{tpu_custom_call.1} parent=0 // pred_fallthru
    _
  %v20 = vld [vmem:[%s0] sm:$0xff]
  %v21 = vld [vmem:[%s0 + $0x8] sm:$0xff]
  %v22 = vld [vmem:[%s0 + $0x10] sm:$0xff]
  %v23 = vld [vmem:[%s0 + $0x18] sm:$0xff]
  %v24 = vld [vmem:[%s0 + $0x20] sm:$0xff]
  %v25 = vld [vmem:[%s0 + $0x28] sm:$0xff]
  %v26 = vld [vmem:[%s0 + $0x30] sm:$0xff]
  %v27 = vld [vmem:[%s0 + $0x38] sm:$0xff]
  %v28 = vld [vmem:[%s0 + $0x40] sm:$0xff]
  %v29 = vld [vmem:[%s0 + $0x48] sm:$0xff]
  %v30 = vld [vmem:[%s0 + $0x50] sm:$0xff]
  %v31 = vld [vmem:[%s0 + $0x58] sm:$0xff]
  %v32 = vld [vmem:[%s0 + $0x60] sm:$0xff]
  %v33 = vld [vmem:[%s0 + $0x68] sm:$0xff]
  %v34 = vld [vmem:[%s0 + $0x70] sm:$0xff]
  %v35 = vld [vmem:[%s0 + $0x78] sm:$0xff]
  %v36 = vld [vmem:[%s0 + $0x80] sm:$0xff]
  %v37 = vld [vmem:[%s0 + $0x88] sm:$0xff]
  %v38 = vld [vmem:[%s0 + $0x90] sm:$0xff]
  %v39 = vld [vmem:[%s0 + $0x98] sm:$0xff]
  %v40 = vld [vmem:[%s0 + $0xa0] sm:$0xff]
  %v41 = vld [vmem:[%s0 + $0xa8] sm:$0xff]
  %v42 = vld [vmem:[%s0 + $0xb0] sm:$0xff]
  %v43 = vld [vmem:[%s0 + $0xb8] sm:$0xff]
  %v44 = vld [vmem:[%s0 + $0xc0] sm:$0xff]
  %v45 = vld [vmem:[%s0 + $0xc8] sm:$0xff]
  %v46 = vld [vmem:[%s0 + $0xd0] sm:$0xff]
  %v47 = vld [vmem:[%s0 + $0xd8] sm:$0xff]
  %v48 = vld [vmem:[%s0 + $0xe0] sm:$0xff]
  %v49 = vld [vmem:[%s0 + $0xe8] sm:$0xff]
  %v50 = vld [vmem:[%s0 + $0xf0] sm:$0xff]
  %v51 = vld [vmem:[%s0 + $0xf8] sm:$0xff]
  %v52 = vld [vmem:[%s0 + $0x100] sm:$0xff]
  %v53 = vld [vmem:[%s0 + $0x108] sm:$0xff]
  %v54 = vld [vmem:[%s0 + $0x110] sm:$0xff]
  %v55 = vld [vmem:[%s0 + $0x118] sm:$0xff]
  %v56 = vld [vmem:[%s0 + $0x120] sm:$0xff]
  %v57 = vld [vmem:[%s0 + $0x128] sm:$0xff]
  %v58 = vld [vmem:[%s0 + $0x130] sm:$0xff]
  %v59 = vld [vmem:[%s0 + $0x138] sm:$0xff]
  %v60 = vld [vmem:[%s0 + $0x140] sm:$0xff]
  %v61 = vld [vmem:[%s0 + $0x148] sm:$0xff]
  %v62 = vld [vmem:[%s0 + $0x150] sm:$0xff]
  %v63 = vld [vmem:[%s0 + $0x158] sm:$0xff]
  %v64 = vld [vmem:[%s0 + $0x160] sm:$0xff]
  %v65 = vld [vmem:[%s0 + $0x168] sm:$0xff]
  %v66 = vld [vmem:[%s0 + $0x170] sm:$0xff]
  %v67 = vld [vmem:[%s0 + $0x178] sm:$0xff]
  %v68 = vld [vmem:[%s0 + $0x180] sm:$0xff]
  %v69 = vld [vmem:[%s0 + $0x188] sm:$0xff]
  %v70 = vld [vmem:[%s0 + $0x190] sm:$0xff]
  %v71 = vld [vmem:[%s0 + $0x198] sm:$0xff]
  %v72 = vld [vmem:[%s0 + $0x1a0] sm:$0xff]
  %v73 = vld [vmem:[%s0 + $0x1a8] sm:$0xff]
  %v74 = vld [vmem:[%s0 + $0x1b0] sm:$0xff]
  %v75 = vld [vmem:[%s0 + $0x1b8] sm:$0xff]
  %v76 = vld [vmem:[%s0 + $0x1c0] sm:$0xff]
  %v77 = vld [vmem:[%s0 + $0x1c8] sm:$0xff]
  %v78 = vld [vmem:[%s0 + $0x1d0] sm:$0xff]
  %v79 = vld [vmem:[%s0 + $0x1d8] sm:$0xff]
  %v80 = vld [vmem:[%s0 + $0x1e0] sm:$0xff]
  %v81 = vld [vmem:[%s0 + $0x1e8] sm:$0xff]
  %v82 = vld [vmem:[%s0 + $0x1f0] sm:$0xff]
  %v83 = vld [vmem:[%s0 + $0x1f8] sm:$0xff]
  %v84 = vld [vmem:[%s1] sm:$0xff]
  %v85 = vld [vmem:[%s1 + $0x8] sm:$0xff]
  %v86 = vld [vmem:[%s1 + $0x10] sm:$0xff]
  %v87 = vld [vmem:[%s1 + $0x18] sm:$0xff]
  %v88 = vld [vmem:[%s2] sm:$0x1]
  %v90 = vperm.slane %v88, 0
  %vm92 = vcmask 261120
  %v94 = vsel %vm92, %v20, 0
  %v97 = vsel %vm92, %v21, 0
  %v100 = vsel %vm92, %v22, 0
  %v103 = vsel %vm92, %v23, 0
  %v106 = vsel %vm92, %v24, 0
  %v109 = vsel %vm92, %v25, 0
  %v112 = vsel %vm92, %v26, 0
  %v115 = vsel %vm92, %v27, 0
  %v118 = vsel %vm92, %v28, 0
  %v121 = vsel %vm92, %v29, 0
  %v124 = vsel %vm92, %v30, 0
  %v127 = vsel %vm92, %v31, 0
  %v130 = vsel %vm92, %v32, 0
  %v133 = vsel %vm92, %v33, 0
  %v136 = vsel %vm92, %v34, 0
  %v139 = vsel %vm92, %v35, 0
  %v142 = vsel %vm92, %v36, 0
  %v145 = vsel %vm92, %v37, 0
  %v148 = vsel %vm92, %v38, 0
  %v151 = vsel %vm92, %v39, 0
  %v154 = vsel %vm92, %v40, 0
  %v157 = vsel %vm92, %v41, 0
  %v160 = vsel %vm92, %v42, 0
  %v163 = vsel %vm92, %v43, 0
  %v166 = vsel %vm92, %v44, 0
  %v169 = vsel %vm92, %v45, 0
  %v172 = vsel %vm92, %v46, 0
  %v175 = vsel %vm92, %v47, 0
  %v178 = vsel %vm92, %v48, 0
  %v181 = vsel %vm92, %v49, 0
  %v184 = vsel %vm92, %v50, 0
  %v187 = vsel %vm92, %v51, 0
  %v190 = vsel %vm92, %v52, 0
  %v193 = vsel %vm92, %v53, 0
  %v196 = vsel %vm92, %v54, 0
  %v199 = vsel %vm92, %v55, 0
  %v202 = vsel %vm92, %v56, 0
  %v205 = vsel %vm92, %v57, 0
  %v208 = vsel %vm92, %v58, 0
  %v211 = vsel %vm92, %v59, 0
  %v214 = vsel %vm92, %v60, 0
  %v217 = vsel %vm92, %v61, 0
  %v220 = vsel %vm92, %v62, 0
  %v223 = vsel %vm92, %v63, 0
  %v226 = vsel %vm92, %v64, 0
  %v229 = vsel %vm92, %v65, 0
  %v232 = vsel %vm92, %v66, 0
  %v235 = vsel %vm92, %v67, 0
  %v238 = vsel %vm92, %v68, 0
  %v241 = vsel %vm92, %v69, 0
  %v244 = vsel %vm92, %v70, 0
  %v247 = vsel %vm92, %v71, 0
  %v250 = vsel %vm92, %v72, 0
  %v253 = vsel %vm92, %v73, 0
  %v256 = vsel %vm92, %v74, 0
  %v259 = vsel %vm92, %v75, 0
  %v262 = vsel %vm92, %v76, 0
  %v265 = vsel %vm92, %v77, 0
  %v268 = vsel %vm92, %v78, 0
  %v271 = vsel %vm92, %v79, 0
  %v274 = vsel %vm92, %v80, 0
  %v277 = vsel %vm92, %v81, 0
  %v280 = vsel %vm92, %v82, 0
  %v283 = vsel %vm92, %v83, 0
  %285 = vmatpush.msra.mxu0 0.0
  %286 = vmatpush.msra.mxu0 0.0
  %287 = vmatpush.msra.mxu0 0.0
  %288 = vmatpush.msra.mxu0 0.0
  %289 = vmatpush.msra.mxu0 0.0
  %290 = vmatpush.msra.mxu0 0.0
  %291 = vmatpush.msra.mxu0 0.0
  %292 = vmatpush.msra.mxu0 0.0
  %293 = vmatpush.msra.mxu0 0.0
  %294 = vmatpush.msra.mxu0 0.0
  %295 = vmatpush.msra.mxu0 0.0
  %296 = vmatpush.msra.mxu0 0.0
  %297 = vmatpush.msra.mxu0 %v87
  %298 = vmatpush.msra.mxu0 %v86
  %299 = vmatpush.msra.mxu0 %v85
  %300 = vmatpush.msra.mxu0 %v84
  %301 = vmatmul.f32.gmra.mxu0 %v94
  %v302 = vpop.f32.mrf.mxu0
  %v303 = vadd.f32 %v90, %v302
  %304 = vmatmul.f32.gmra.mxu0 %v97
  %v305 = vpop.f32.mrf.mxu0
  %v306 = vadd.f32 %v90, %v305
  %307 = vmatmul.f32.gmra.mxu0 %v100
  %v308 = vpop.f32.mrf.mxu0
  %v309 = vadd.f32 %v90, %v308
  %310 = vmatmul.f32.gmra.mxu0 %v103
  %v311 = vpop.f32.mrf.mxu0
  %v312 = vadd.f32 %v90, %v311
  %313 = vmatmul.f32.gmra.mxu0 %v106
  %v314 = vpop.f32.mrf.mxu0
  %v315 = vadd.f32 %v90, %v314
  %316 = vmatmul.f32.gmra.mxu0 %v109
  %v317 = vpop.f32.mrf.mxu0
  %v318 = vadd.f32 %v90, %v317
  %319 = vmatmul.f32.gmra.mxu0 %v112
  %v320 = vpop.f32.mrf.mxu0
  %v321 = vadd.f32 %v90, %v320
  %322 = vmatmul.f32.gmra.mxu0 %v115
  %v323 = vpop.f32.mrf.mxu0
  %v324 = vadd.f32 %v90, %v323
  %325 = vmatmul.f32.gmra.mxu0 %v118
  %v326 = vpop.f32.mrf.mxu0
  %v327 = vadd.f32 %v90, %v326
  %328 = vmatmul.f32.gmra.mxu0 %v121
  %v329 = vpop.f32.mrf.mxu0
  %v330 = vadd.f32 %v90, %v329
  %331 = vmatmul.f32.gmra.mxu0 %v124
  %v332 = vpop.f32.mrf.mxu0
  %v333 = vadd.f32 %v90, %v332
  %334 = vmatmul.f32.gmra.mxu0 %v127
  %v335 = vpop.f32.mrf.mxu0
  %v336 = vadd.f32 %v90, %v335
  %337 = vmatmul.f32.gmra.mxu0 %v130
  %v338 = vpop.f32.mrf.mxu0
  %v339 = vadd.f32 %v90, %v338
  %340 = vmatmul.f32.gmra.mxu0 %v133
  %v341 = vpop.f32.mrf.mxu0
  %v342 = vadd.f32 %v90, %v341
  %343 = vmatmul.f32.gmra.mxu0 %v136
  %v344 = vpop.f32.mrf.mxu0
  %v345 = vadd.f32 %v90, %v344
  %346 = vmatmul.f32.gmra.mxu0 %v139
  %v347 = vpop.f32.mrf.mxu0
  %v348 = vadd.f32 %v90, %v347
  %349 = vmatmul.f32.gmra.mxu0 %v142
  %v350 = vpop.f32.mrf.mxu0
  %v351 = vadd.f32 %v90, %v350
  %352 = vmatmul.f32.gmra.mxu0 %v145
  %v353 = vpop.f32.mrf.mxu0
  %v354 = vadd.f32 %v90, %v353
  %355 = vmatmul.f32.gmra.mxu0 %v148
  %v356 = vpop.f32.mrf.mxu0
  %v357 = vadd.f32 %v90, %v356
  %358 = vmatmul.f32.gmra.mxu0 %v151
  %v359 = vpop.f32.mrf.mxu0
  %v360 = vadd.f32 %v90, %v359
  %361 = vmatmul.f32.gmra.mxu0 %v154
  %v362 = vpop.f32.mrf.mxu0
  %v363 = vadd.f32 %v90, %v362
  %364 = vmatmul.f32.gmra.mxu0 %v157
  %v365 = vpop.f32.mrf.mxu0
  %v366 = vadd.f32 %v90, %v365
  %367 = vmatmul.f32.gmra.mxu0 %v160
  %v368 = vpop.f32.mrf.mxu0
  %v369 = vadd.f32 %v90, %v368
  %370 = vmatmul.f32.gmra.mxu0 %v163
  %v371 = vpop.f32.mrf.mxu0
  %v372 = vadd.f32 %v90, %v371
  %373 = vmatmul.f32.gmra.mxu0 %v166
  %v374 = vpop.f32.mrf.mxu0
  %v375 = vadd.f32 %v90, %v374
  %376 = vmatmul.f32.gmra.mxu0 %v169
  %v377 = vpop.f32.mrf.mxu0
  %v378 = vadd.f32 %v90, %v377
  %379 = vmatmul.f32.gmra.mxu0 %v172
  %v380 = vpop.f32.mrf.mxu0
  %v381 = vadd.f32 %v90, %v380
  %382 = vmatmul.f32.gmra.mxu0 %v175
  %v383 = vpop.f32.mrf.mxu0
  %v384 = vadd.f32 %v90, %v383
  %385 = vmatmul.f32.gmra.mxu0 %v178
  %v386 = vpop.f32.mrf.mxu0
  %v387 = vadd.f32 %v90, %v386
  %388 = vmatmul.f32.gmra.mxu0 %v181
  %v389 = vpop.f32.mrf.mxu0
  %v390 = vadd.f32 %v90, %v389
  %391 = vmatmul.f32.gmra.mxu0 %v184
  %v392 = vpop.f32.mrf.mxu0
  %v393 = vadd.f32 %v90, %v392
  %394 = vmatmul.f32.gmra.mxu0 %v187
  %v395 = vpop.f32.mrf.mxu0
  %v396 = vadd.f32 %v90, %v395
  %397 = vmatmul.f32.gmra.mxu0 %v190
  %v398 = vpop.f32.mrf.mxu0
  %v399 = vadd.f32 %v90, %v398
  %400 = vmatmul.f32.gmra.mxu0 %v193
  %v401 = vpop.f32.mrf.mxu0
  %v402 = vadd.f32 %v90, %v401
  %403 = vmatmul.f32.gmra.mxu0 %v196
  %v404 = vpop.f32.mrf.mxu0
  %v405 = vadd.f32 %v90, %v404
  %406 = vmatmul.f32.gmra.mxu0 %v199
  %v407 = vpop.f32.mrf.mxu0
  %v408 = vadd.f32 %v90, %v407
  %409 = vmatmul.f32.gmra.mxu0 %v202
  %v410 = vpop.f32.mrf.mxu0
  %v411 = vadd.f32 %v90, %v410
  %412 = vmatmul.f32.gmra.mxu0 %v205
  %v413 = vpop.f32.mrf.mxu0
  %v414 = vadd.f32 %v90, %v413
  %415 = vmatmul.f32.gmra.mxu0 %v208
  %v416 = vpop.f32.mrf.mxu0
  %v417 = vadd.f32 %v90, %v416
  %418 = vmatmul.f32.gmra.mxu0 %v211
  %v419 = vpop.f32.mrf.mxu0
  %v420 = vadd.f32 %v90, %v419
  %421 = vmatmul.f32.gmra.mxu0 %v214
  %v422 = vpop.f32.mrf.mxu0
  %v423 = vadd.f32 %v90, %v422
  %424 = vmatmul.f32.gmra.mxu0 %v217
  %v425 = vpop.f32.mrf.mxu0
  %v426 = vadd.f32 %v90, %v425
  %427 = vmatmul.f32.gmra.mxu0 %v220
  %v428 = vpop.f32.mrf.mxu0
  %v429 = vadd.f32 %v90, %v428
  %430 = vmatmul.f32.gmra.mxu0 %v223
  %v431 = vpop.f32.mrf.mxu0
  %v432 = vadd.f32 %v90, %v431
  %433 = vmatmul.f32.gmra.mxu0 %v226
  %v434 = vpop.f32.mrf.mxu0
  %v435 = vadd.f32 %v90, %v434
  %436 = vmatmul.f32.gmra.mxu0 %v229
  %v437 = vpop.f32.mrf.mxu0
  %v438 = vadd.f32 %v90, %v437
  %439 = vmatmul.f32.gmra.mxu0 %v232
  %v440 = vpop.f32.mrf.mxu0
  %v441 = vadd.f32 %v90, %v440
  %442 = vmatmul.f32.gmra.mxu0 %v235
  %v443 = vpop.f32.mrf.mxu0
  %v444 = vadd.f32 %v90, %v443
  %445 = vmatmul.f32.gmra.mxu0 %v238
  %v446 = vpop.f32.mrf.mxu0
  %v447 = vadd.f32 %v90, %v446
  %448 = vmatmul.f32.gmra.mxu0 %v241
  %v449 = vpop.f32.mrf.mxu0
  %v450 = vadd.f32 %v90, %v449
  %451 = vmatmul.f32.gmra.mxu0 %v244
  %v452 = vpop.f32.mrf.mxu0
  %v453 = vadd.f32 %v90, %v452
  %454 = vmatmul.f32.gmra.mxu0 %v247
  %v455 = vpop.f32.mrf.mxu0
  %v456 = vadd.f32 %v90, %v455
  %457 = vmatmul.f32.gmra.mxu0 %v250
  %v458 = vpop.f32.mrf.mxu0
  %v459 = vadd.f32 %v90, %v458
  %460 = vmatmul.f32.gmra.mxu0 %v253
  %v461 = vpop.f32.mrf.mxu0
  %v462 = vadd.f32 %v90, %v461
  %463 = vmatmul.f32.gmra.mxu0 %v256
  %v464 = vpop.f32.mrf.mxu0
  %v465 = vadd.f32 %v90, %v464
  %466 = vmatmul.f32.gmra.mxu0 %v259
  %v467 = vpop.f32.mrf.mxu0
  %v468 = vadd.f32 %v90, %v467
  %469 = vmatmul.f32.gmra.mxu0 %v262
  %v470 = vpop.f32.mrf.mxu0
  %v471 = vadd.f32 %v90, %v470
  %472 = vmatmul.f32.gmra.mxu0 %v265
  %v473 = vpop.f32.mrf.mxu0
  %v474 = vadd.f32 %v90, %v473
  %475 = vmatmul.f32.gmra.mxu0 %v268
  %v476 = vpop.f32.mrf.mxu0
  %v477 = vadd.f32 %v90, %v476
  %478 = vmatmul.f32.gmra.mxu0 %v271
  %v479 = vpop.f32.mrf.mxu0
  %v480 = vadd.f32 %v90, %v479
  %481 = vmatmul.f32.gmra.mxu0 %v274
  %v482 = vpop.f32.mrf.mxu0
  %v483 = vadd.f32 %v90, %v482
  %484 = vmatmul.f32.gmra.mxu0 %v277
  %v485 = vpop.f32.mrf.mxu0
  %v486 = vadd.f32 %v90, %v485
  %487 = vmatmul.f32.gmra.mxu0 %v280
  %v488 = vpop.f32.mrf.mxu0
  %v489 = vadd.f32 %v90, %v488
  %490 = vmatmul.f32.gmra.mxu0 %v283
  %v491 = vpop.f32.mrf.mxu0
  %v492 = vadd.f32 %v90, %v491
  %493 = vdwg.mxu0
  %v494 = vmax.f32 %v303, 0.0
  %v495 = vmax.f32 %v306, 0.0
  %v496 = vmax.f32 %v309, 0.0
  %v497 = vmax.f32 %v312, 0.0
  %v498 = vmax.f32 %v315, 0.0
  %v499 = vmax.f32 %v318, 0.0
  %v500 = vmax.f32 %v321, 0.0
  %v501 = vmax.f32 %v324, 0.0
  %v502 = vmax.f32 %v327, 0.0
  %v503 = vmax.f32 %v330, 0.0
  %v504 = vmax.f32 %v333, 0.0
  %v505 = vmax.f32 %v336, 0.0
  %v506 = vmax.f32 %v339, 0.0
  %v507 = vmax.f32 %v342, 0.0
  %v508 = vmax.f32 %v345, 0.0
  %v509 = vmax.f32 %v348, 0.0
  %v510 = vmax.f32 %v351, 0.0
  %v511 = vmax.f32 %v354, 0.0
  %v512 = vmax.f32 %v357, 0.0
  %v513 = vmax.f32 %v360, 0.0
  %v514 = vmax.f32 %v363, 0.0
  %v515 = vmax.f32 %v366, 0.0
  %v516 = vmax.f32 %v369, 0.0
  %v517 = vmax.f32 %v372, 0.0
  %v518 = vmax.f32 %v375, 0.0
  %v519 = vmax.f32 %v378, 0.0
  %v520 = vmax.f32 %v381, 0.0
  %v521 = vmax.f32 %v384, 0.0
  %v522 = vmax.f32 %v387, 0.0
  %v523 = vmax.f32 %v390, 0.0
  %v524 = vmax.f32 %v393, 0.0
  %v525 = vmax.f32 %v396, 0.0
  %v526 = vmax.f32 %v399, 0.0
  %v527 = vmax.f32 %v402, 0.0
  %v528 = vmax.f32 %v405, 0.0
  %v529 = vmax.f32 %v408, 0.0
  %v530 = vmax.f32 %v411, 0.0
  %v531 = vmax.f32 %v414, 0.0
  %v532 = vmax.f32 %v417, 0.0
  %v533 = vmax.f32 %v420, 0.0
  %v534 = vmax.f32 %v423, 0.0
  %v535 = vmax.f32 %v426, 0.0
  %v536 = vmax.f32 %v429, 0.0
  %v537 = vmax.f32 %v432, 0.0
  %v538 = vmax.f32 %v435, 0.0
  %v539 = vmax.f32 %v438, 0.0
  %v540 = vmax.f32 %v441, 0.0
  %v541 = vmax.f32 %v444, 0.0
  %v542 = vmax.f32 %v447, 0.0
  %v543 = vmax.f32 %v450, 0.0
  %v544 = vmax.f32 %v453, 0.0
  %v545 = vmax.f32 %v456, 0.0
  %v546 = vmax.f32 %v459, 0.0
  %v547 = vmax.f32 %v462, 0.0
  %v548 = vmax.f32 %v465, 0.0
  %v549 = vmax.f32 %v468, 0.0
  %v550 = vmax.f32 %v471, 0.0
  %v551 = vmax.f32 %v474, 0.0
  %v552 = vmax.f32 %v477, 0.0
  %v553 = vmax.f32 %v480, 0.0
  %v554 = vmax.f32 %v483, 0.0
  %v555 = vmax.f32 %v486, 0.0
  %v556 = vmax.f32 %v489, 0.0
  %v557 = vmax.f32 %v492, 0.0
  %v558 = vld [vmem:[%s3] sm:$0xff]
  %v559 = vld [vmem:[%s3 + $0x8] sm:$0xff]
  %v560 = vld [vmem:[%s3 + $0x10] sm:$0xff]
  %v561 = vld [vmem:[%s3 + $0x18] sm:$0xff]
  %v562 = vld [vmem:[%s3 + $0x20] sm:$0xff]
  %v563 = vld [vmem:[%s3 + $0x28] sm:$0xff]
  %v564 = vld [vmem:[%s3 + $0x30] sm:$0xff]
  %v565 = vld [vmem:[%s3 + $0x38] sm:$0xff]
  %v566 = vld [vmem:[%s4] sm:$0x1]
  %v568 = vperm.slane %v566, 0
  %vm570 = vcmask 523264
  %v572 = vsel %vm570, %v494, 0
  %v575 = vsel %vm570, %v495, 0
  %v578 = vsel %vm570, %v496, 0
  %v581 = vsel %vm570, %v497, 0
  %v584 = vsel %vm570, %v498, 0
  %v587 = vsel %vm570, %v499, 0
  %v590 = vsel %vm570, %v500, 0
  %v593 = vsel %vm570, %v501, 0
  %v596 = vsel %vm570, %v502, 0
  %v599 = vsel %vm570, %v503, 0
  %v602 = vsel %vm570, %v504, 0
  %v605 = vsel %vm570, %v505, 0
  %v608 = vsel %vm570, %v506, 0
  %v611 = vsel %vm570, %v507, 0
  %v614 = vsel %vm570, %v508, 0
  %v617 = vsel %vm570, %v509, 0
  %v620 = vsel %vm570, %v510, 0
  %v623 = vsel %vm570, %v511, 0
  %v626 = vsel %vm570, %v512, 0
  %v629 = vsel %vm570, %v513, 0
  %v632 = vsel %vm570, %v514, 0
  %v635 = vsel %vm570, %v515, 0
  %v638 = vsel %vm570, %v516, 0
  %v641 = vsel %vm570, %v517, 0
  %v644 = vsel %vm570, %v518, 0
  %v647 = vsel %vm570, %v519, 0
  %v650 = vsel %vm570, %v520, 0
  %v653 = vsel %vm570, %v521, 0
  %v656 = vsel %vm570, %v522, 0
  %v659 = vsel %vm570, %v523, 0
  %v662 = vsel %vm570, %v524, 0
  %v665 = vsel %vm570, %v525, 0
  %v668 = vsel %vm570, %v526, 0
  %v671 = vsel %vm570, %v527, 0
  %v674 = vsel %vm570, %v528, 0
  %v677 = vsel %vm570, %v529, 0
  %v680 = vsel %vm570, %v530, 0
  %v683 = vsel %vm570, %v531, 0
  %v686 = vsel %vm570, %v532, 0
  %v689 = vsel %vm570, %v533, 0
  %v692 = vsel %vm570, %v534, 0
  %v695 = vsel %vm570, %v535, 0
  %v698 = vsel %vm570, %v536, 0
  %v701 = vsel %vm570, %v537, 0
  %v704 = vsel %vm570, %v538, 0
  %v707 = vsel %vm570, %v539, 0
  %v710 = vsel %vm570, %v540, 0
  %v713 = vsel %vm570, %v541, 0
  %v716 = vsel %vm570, %v542, 0
  %v719 = vsel %vm570, %v543, 0
  %v722 = vsel %vm570, %v544, 0
  %v725 = vsel %vm570, %v545, 0
  %v728 = vsel %vm570, %v546, 0
  %v731 = vsel %vm570, %v547, 0
  %v734 = vsel %vm570, %v548, 0
  %v737 = vsel %vm570, %v549, 0
  %v740 = vsel %vm570, %v550, 0
  %v743 = vsel %vm570, %v551, 0
  %v746 = vsel %vm570, %v552, 0
  %v749 = vsel %vm570, %v553, 0
  %v752 = vsel %vm570, %v554, 0
  %v755 = vsel %vm570, %v555, 0
  %v758 = vsel %vm570, %v556, 0
  %v761 = vsel %vm570, %v557, 0
  %763 = vmatpush.msra.mxu0 0.0
  %764 = vmatpush.msra.mxu0 0.0
  %765 = vmatpush.msra.mxu0 0.0
  %766 = vmatpush.msra.mxu0 0.0
  %767 = vmatpush.msra.mxu0 0.0
  %768 = vmatpush.msra.mxu0 0.0
  %769 = vmatpush.msra.mxu0 0.0
  %770 = vmatpush.msra.mxu0 0.0
  %771 = vmatpush.msra.mxu0 %v565
  %772 = vmatpush.msra.mxu0 %v564
  %773 = vmatpush.msra.mxu0 %v563
  %774 = vmatpush.msra.mxu0 %v562
  %775 = vmatpush.msra.mxu0 %v561
  %776 = vmatpush.msra.mxu0 %v560
  %777 = vmatpush.msra.mxu0 %v559
  %778 = vmatpush.msra.mxu0 %v558
  %779 = vmatmul.f32.gmra.mxu0 %v572
  %v780 = vpop.f32.mrf.mxu0
  %v781 = vadd.f32 %v568, %v780
  %782 = vmatmul.f32.gmra.mxu0 %v575
  %v783 = vpop.f32.mrf.mxu0
  %v784 = vadd.f32 %v568, %v783
  %785 = vmatmul.f32.gmra.mxu0 %v578
  %v786 = vpop.f32.mrf.mxu0
  %v787 = vadd.f32 %v568, %v786
  %788 = vmatmul.f32.gmra.mxu0 %v581
  %v789 = vpop.f32.mrf.mxu0
  %v790 = vadd.f32 %v568, %v789
  %791 = vmatmul.f32.gmra.mxu0 %v584
  %v792 = vpop.f32.mrf.mxu0
  %v793 = vadd.f32 %v568, %v792
  %794 = vmatmul.f32.gmra.mxu0 %v587
  %v795 = vpop.f32.mrf.mxu0
  %v796 = vadd.f32 %v568, %v795
  %797 = vmatmul.f32.gmra.mxu0 %v590
  %v798 = vpop.f32.mrf.mxu0
  %v799 = vadd.f32 %v568, %v798
  %800 = vmatmul.f32.gmra.mxu0 %v593
  %v801 = vpop.f32.mrf.mxu0
  %v802 = vadd.f32 %v568, %v801
  %803 = vmatmul.f32.gmra.mxu0 %v596
  %v804 = vpop.f32.mrf.mxu0
  %v805 = vadd.f32 %v568, %v804
  %806 = vmatmul.f32.gmra.mxu0 %v599
  %v807 = vpop.f32.mrf.mxu0
  %v808 = vadd.f32 %v568, %v807
  %809 = vmatmul.f32.gmra.mxu0 %v602
  %v810 = vpop.f32.mrf.mxu0
  %v811 = vadd.f32 %v568, %v810
  %812 = vmatmul.f32.gmra.mxu0 %v605
  %v813 = vpop.f32.mrf.mxu0
  %v814 = vadd.f32 %v568, %v813
  %815 = vmatmul.f32.gmra.mxu0 %v608
  %v816 = vpop.f32.mrf.mxu0
  %v817 = vadd.f32 %v568, %v816
  %818 = vmatmul.f32.gmra.mxu0 %v611
  %v819 = vpop.f32.mrf.mxu0
  %v820 = vadd.f32 %v568, %v819
  %821 = vmatmul.f32.gmra.mxu0 %v614
  %v822 = vpop.f32.mrf.mxu0
  %v823 = vadd.f32 %v568, %v822
  %824 = vmatmul.f32.gmra.mxu0 %v617
  %v825 = vpop.f32.mrf.mxu0
  %v826 = vadd.f32 %v568, %v825
  %827 = vmatmul.f32.gmra.mxu0 %v620
  %v828 = vpop.f32.mrf.mxu0
  %v829 = vadd.f32 %v568, %v828
  %830 = vmatmul.f32.gmra.mxu0 %v623
  %v831 = vpop.f32.mrf.mxu0
  %v832 = vadd.f32 %v568, %v831
  %833 = vmatmul.f32.gmra.mxu0 %v626
  %v834 = vpop.f32.mrf.mxu0
  %v835 = vadd.f32 %v568, %v834
  %836 = vmatmul.f32.gmra.mxu0 %v629
  %v837 = vpop.f32.mrf.mxu0
  %v838 = vadd.f32 %v568, %v837
  %839 = vmatmul.f32.gmra.mxu0 %v632
  %v840 = vpop.f32.mrf.mxu0
  %v841 = vadd.f32 %v568, %v840
  %842 = vmatmul.f32.gmra.mxu0 %v635
  %v843 = vpop.f32.mrf.mxu0
  %v844 = vadd.f32 %v568, %v843
  %845 = vmatmul.f32.gmra.mxu0 %v638
  %v846 = vpop.f32.mrf.mxu0
  %v847 = vadd.f32 %v568, %v846
  %848 = vmatmul.f32.gmra.mxu0 %v641
  %v849 = vpop.f32.mrf.mxu0
  %v850 = vadd.f32 %v568, %v849
  %851 = vmatmul.f32.gmra.mxu0 %v644
  %v852 = vpop.f32.mrf.mxu0
  %v853 = vadd.f32 %v568, %v852
  %854 = vmatmul.f32.gmra.mxu0 %v647
  %v855 = vpop.f32.mrf.mxu0
  %v856 = vadd.f32 %v568, %v855
  %857 = vmatmul.f32.gmra.mxu0 %v650
  %v858 = vpop.f32.mrf.mxu0
  %v859 = vadd.f32 %v568, %v858
  %860 = vmatmul.f32.gmra.mxu0 %v653
  %v861 = vpop.f32.mrf.mxu0
  %v862 = vadd.f32 %v568, %v861
  %863 = vmatmul.f32.gmra.mxu0 %v656
  %v864 = vpop.f32.mrf.mxu0
  %v865 = vadd.f32 %v568, %v864
  %866 = vmatmul.f32.gmra.mxu0 %v659
  %v867 = vpop.f32.mrf.mxu0
  %v868 = vadd.f32 %v568, %v867
  %869 = vmatmul.f32.gmra.mxu0 %v662
  %v870 = vpop.f32.mrf.mxu0
  %v871 = vadd.f32 %v568, %v870
  %872 = vmatmul.f32.gmra.mxu0 %v665
  %v873 = vpop.f32.mrf.mxu0
  %v874 = vadd.f32 %v568, %v873
  %875 = vmatmul.f32.gmra.mxu0 %v668
  %v876 = vpop.f32.mrf.mxu0
  %v877 = vadd.f32 %v568, %v876
  %878 = vmatmul.f32.gmra.mxu0 %v671
  %v879 = vpop.f32.mrf.mxu0
  %v880 = vadd.f32 %v568, %v879
  %881 = vmatmul.f32.gmra.mxu0 %v674
  %v882 = vpop.f32.mrf.mxu0
  %v883 = vadd.f32 %v568, %v882
  %884 = vmatmul.f32.gmra.mxu0 %v677
  %v885 = vpop.f32.mrf.mxu0
  %v886 = vadd.f32 %v568, %v885
  %887 = vmatmul.f32.gmra.mxu0 %v680
  %v888 = vpop.f32.mrf.mxu0
  %v889 = vadd.f32 %v568, %v888
  %890 = vmatmul.f32.gmra.mxu0 %v683
  %v891 = vpop.f32.mrf.mxu0
  %v892 = vadd.f32 %v568, %v891
  %893 = vmatmul.f32.gmra.mxu0 %v686
  %v894 = vpop.f32.mrf.mxu0
  %v895 = vadd.f32 %v568, %v894
  %896 = vmatmul.f32.gmra.mxu0 %v689
  %v897 = vpop.f32.mrf.mxu0
  %v898 = vadd.f32 %v568, %v897
  %899 = vmatmul.f32.gmra.mxu0 %v692
  %v900 = vpop.f32.mrf.mxu0
  %v901 = vadd.f32 %v568, %v900
  %902 = vmatmul.f32.gmra.mxu0 %v695
  %v903 = vpop.f32.mrf.mxu0
  %v904 = vadd.f32 %v568, %v903
  %905 = vmatmul.f32.gmra.mxu0 %v698
  %v906 = vpop.f32.mrf.mxu0
  %v907 = vadd.f32 %v568, %v906
  %908 = vmatmul.f32.gmra.mxu0 %v701
  %v909 = vpop.f32.mrf.mxu0
  %v910 = vadd.f32 %v568, %v909
  %911 = vmatmul.f32.gmra.mxu0 %v704
  %v912 = vpop.f32.mrf.mxu0
  %v913 = vadd.f32 %v568, %v912
  %914 = vmatmul.f32.gmra.mxu0 %v707
  %v915 = vpop.f32.mrf.mxu0
  %v916 = vadd.f32 %v568, %v915
  %917 = vmatmul.f32.gmra.mxu0 %v710
  %v918 = vpop.f32.mrf.mxu0
  %v919 = vadd.f32 %v568, %v918
  %920 = vmatmul.f32.gmra.mxu0 %v713
  %v921 = vpop.f32.mrf.mxu0
  %v922 = vadd.f32 %v568, %v921
  %923 = vmatmul.f32.gmra.mxu0 %v716
  %v924 = vpop.f32.mrf.mxu0
  %v925 = vadd.f32 %v568, %v924
  %926 = vmatmul.f32.gmra.mxu0 %v719
  %v927 = vpop.f32.mrf.mxu0
  %v928 = vadd.f32 %v568, %v927
  %929 = vmatmul.f32.gmra.mxu0 %v722
  %v930 = vpop.f32.mrf.mxu0
  %v931 = vadd.f32 %v568, %v930
  %932 = vmatmul.f32.gmra.mxu0 %v725
  %v933 = vpop.f32.mrf.mxu0
  %v934 = vadd.f32 %v568, %v933
  %935 = vmatmul.f32.gmra.mxu0 %v728
  %v936 = vpop.f32.mrf.mxu0
  %v937 = vadd.f32 %v568, %v936
  %938 = vmatmul.f32.gmra.mxu0 %v731
  %v939 = vpop.f32.mrf.mxu0
  %v940 = vadd.f32 %v568, %v939
  %941 = vmatmul.f32.gmra.mxu0 %v734
  %v942 = vpop.f32.mrf.mxu0
  %v943 = vadd.f32 %v568, %v942
  %944 = vmatmul.f32.gmra.mxu0 %v737
  %v945 = vpop.f32.mrf.mxu0
  %v946 = vadd.f32 %v568, %v945
  %947 = vmatmul.f32.gmra.mxu0 %v740
  %v948 = vpop.f32.mrf.mxu0
  %v949 = vadd.f32 %v568, %v948
  %950 = vmatmul.f32.gmra.mxu0 %v743
  %v951 = vpop.f32.mrf.mxu0
  %v952 = vadd.f32 %v568, %v951
  %953 = vmatmul.f32.gmra.mxu0 %v746
  %v954 = vpop.f32.mrf.mxu0
  %v955 = vadd.f32 %v568, %v954
  %956 = vmatmul.f32.gmra.mxu0 %v749
  %v957 = vpop.f32.mrf.mxu0
  %v958 = vadd.f32 %v568, %v957
  %959 = vmatmul.f32.gmra.mxu0 %v752
  %v960 = vpop.f32.mrf.mxu0
  %v961 = vadd.f32 %v568, %v960
  %962 = vmatmul.f32.gmra.mxu0 %v755
  %v963 = vpop.f32.mrf.mxu0
  %v964 = vadd.f32 %v568, %v963
  %965 = vmatmul.f32.gmra.mxu0 %v758
  %v966 = vpop.f32.mrf.mxu0
  %v967 = vadd.f32 %v568, %v966
  %968 = vmatmul.f32.gmra.mxu0 %v761
  %v969 = vpop.f32.mrf.mxu0
  %v970 = vadd.f32 %v568, %v969
  %971 = vdwg.mxu0
  %972 = vst.msk [vmem:[%s5] sm:$0xff] %vm570, %v781
  %973 = vst.msk [vmem:[%s5 + $0x8] sm:$0xff] %vm570, %v784
  %974 = vst.msk [vmem:[%s5 + $0x10] sm:$0xff] %vm570, %v787
  %975 = vst.msk [vmem:[%s5 + $0x18] sm:$0xff] %vm570, %v790
  %976 = vst.msk [vmem:[%s5 + $0x20] sm:$0xff] %vm570, %v793
  %977 = vst.msk [vmem:[%s5 + $0x28] sm:$0xff] %vm570, %v796
  %978 = vst.msk [vmem:[%s5 + $0x30] sm:$0xff] %vm570, %v799
  %979 = vst.msk [vmem:[%s5 + $0x38] sm:$0xff] %vm570, %v802
  %980 = vst.msk [vmem:[%s5 + $0x40] sm:$0xff] %vm570, %v805
  %981 = vst.msk [vmem:[%s5 + $0x48] sm:$0xff] %vm570, %v808
  %982 = vst.msk [vmem:[%s5 + $0x50] sm:$0xff] %vm570, %v811
  %983 = vst.msk [vmem:[%s5 + $0x58] sm:$0xff] %vm570, %v814
  %984 = vst.msk [vmem:[%s5 + $0x60] sm:$0xff] %vm570, %v817
  %985 = vst.msk [vmem:[%s5 + $0x68] sm:$0xff] %vm570, %v820
  %986 = vst.msk [vmem:[%s5 + $0x70] sm:$0xff] %vm570, %v823
  %987 = vst.msk [vmem:[%s5 + $0x78] sm:$0xff] %vm570, %v826
  %988 = vst.msk [vmem:[%s5 + $0x80] sm:$0xff] %vm570, %v829
  %989 = vst.msk [vmem:[%s5 + $0x88] sm:$0xff] %vm570, %v832
  %990 = vst.msk [vmem:[%s5 + $0x90] sm:$0xff] %vm570, %v835
  %991 = vst.msk [vmem:[%s5 + $0x98] sm:$0xff] %vm570, %v838
  %992 = vst.msk [vmem:[%s5 + $0xa0] sm:$0xff] %vm570, %v841
  %993 = vst.msk [vmem:[%s5 + $0xa8] sm:$0xff] %vm570, %v844
  %994 = vst.msk [vmem:[%s5 + $0xb0] sm:$0xff] %vm570, %v847
  %995 = vst.msk [vmem:[%s5 + $0xb8] sm:$0xff] %vm570, %v850
  %996 = vst.msk [vmem:[%s5 + $0xc0] sm:$0xff] %vm570, %v853
  %997 = vst.msk [vmem:[%s5 + $0xc8] sm:$0xff] %vm570, %v856
  %998 = vst.msk [vmem:[%s5 + $0xd0] sm:$0xff] %vm570, %v859
  %999 = vst.msk [vmem:[%s5 + $0xd8] sm:$0xff] %vm570, %v862
  %1000 = vst.msk [vmem:[%s5 + $0xe0] sm:$0xff] %vm570, %v865
  %1001 = vst.msk [vmem:[%s5 + $0xe8] sm:$0xff] %vm570, %v868
  %1002 = vst.msk [vmem:[%s5 + $0xf0] sm:$0xff] %vm570, %v871
  %1003 = vst.msk [vmem:[%s5 + $0xf8] sm:$0xff] %vm570, %v874
  %1004 = vst.msk [vmem:[%s5 + $0x100] sm:$0xff] %vm570, %v877
  %1005 = vst.msk [vmem:[%s5 + $0x108] sm:$0xff] %vm570, %v880
  %1006 = vst.msk [vmem:[%s5 + $0x110] sm:$0xff] %vm570, %v883
  %1007 = vst.msk [vmem:[%s5 + $0x118] sm:$0xff] %vm570, %v886
  %1008 = vst.msk [vmem:[%s5 + $0x120] sm:$0xff] %vm570, %v889
  %1009 = vst.msk [vmem:[%s5 + $0x128] sm:$0xff] %vm570, %v892
  %1010 = vst.msk [vmem:[%s5 + $0x130] sm:$0xff] %vm570, %v895
  %1011 = vst.msk [vmem:[%s5 + $0x138] sm:$0xff] %vm570, %v898
  %1012 = vst.msk [vmem:[%s5 + $0x140] sm:$0xff] %vm570, %v901
  %1013 = vst.msk [vmem:[%s5 + $0x148] sm:$0xff] %vm570, %v904
  %1014 = vst.msk [vmem:[%s5 + $0x150] sm:$0xff] %vm570, %v907
  %1015 = vst.msk [vmem:[%s5 + $0x158] sm:$0xff] %vm570, %v910
  %1016 = vst.msk [vmem:[%s5 + $0x160] sm:$0xff] %vm570, %v913
  %1017 = vst.msk [vmem:[%s5 + $0x168] sm:$0xff] %vm570, %v916
  %1018 = vst.msk [vmem:[%s5 + $0x170] sm:$0xff] %vm570, %v919
  %1019 = vst.msk [vmem:[%s5 + $0x178] sm:$0xff] %vm570, %v922
  %1020 = vst.msk [vmem:[%s5 + $0x180] sm:$0xff] %vm570, %v925
  %1021 = vst.msk [vmem:[%s5 + $0x188] sm:$0xff] %vm570, %v928
  %1022 = vst.msk [vmem:[%s5 + $0x190] sm:$0xff] %vm570, %v931
  %1023 = vst.msk [vmem:[%s5 + $0x198] sm:$0xff] %vm570, %v934
  %1024 = vst.msk [vmem:[%s5 + $0x1a0] sm:$0xff] %vm570, %v937
  %1025 = vst.msk [vmem:[%s5 + $0x1a8] sm:$0xff] %vm570, %v940
  %1026 = vst.msk [vmem:[%s5 + $0x1b0] sm:$0xff] %vm570, %v943
  %1027 = vst.msk [vmem:[%s5 + $0x1b8] sm:$0xff] %vm570, %v946
  %1028 = vst.msk [vmem:[%s5 + $0x1c0] sm:$0xff] %vm570, %v949
  %1029 = vst.msk [vmem:[%s5 + $0x1c8] sm:$0xff] %vm570, %v952
  %1030 = vst.msk [vmem:[%s5 + $0x1d0] sm:$0xff] %vm570, %v955
  %1031 = vst.msk [vmem:[%s5 + $0x1d8] sm:$0xff] %vm570, %v958
  %1032 = vst.msk [vmem:[%s5 + $0x1e0] sm:$0xff] %vm570, %v961
  %1033 = vst.msk [vmem:[%s5 + $0x1e8] sm:$0xff] %vm570, %v964
  %1034 = vst.msk [vmem:[%s5 + $0x1f0] sm:$0xff] %vm570, %v967
  %1035 = vst.msk [vmem:[%s5 + $0x1f8] sm:$0xff] %vm570, %v970
  // Predicated region
  $region22: #{tpu_custom_call.1} parent=0 // pred_check
    _
  $region23: #{tpu_custom_call.1} parent=0 // pred_check_branch
    %1037 = sbr.rel (0) target = $region25
  $region24: #{tpu_custom_call.1} parent=0 // pred_region
    _
  $region25: #{tpu_custom_call.1} parent=0 // pred_fallthru
    _
  // Predicated region
  $region26: #{tpu_custom_call.1} parent=0 // pred_check
    _
  $region27: #{tpu_custom_call.1} parent=0 // pred_check_branch
    %1039 = sbr.rel (0) target = $region29
  $region28: #{tpu_custom_call.1} parent=0 // pred_region
    _
  $region29: #{tpu_custom_call.1} parent=0 // pred_fallthru
    _

</llo_original>
